<compile_context>
chip_gen: v5e
topology: v5e:2x2
jax: 0.10.0
libtpu: 0.0.40
codegen_flags: <defaults>
</compile_context>

<pallas_src>
import jax
import jax.numpy as jnp
from jax.experimental import pallas as pl
from jax.experimental.pallas import tpu as pltpu

ALPHA = 50.0  # matches custom_activatipon(alpha=50)
_LANES = 128


def _custom_act_kernel(x_ref, o_ref):
    # Load in the original (possibly narrow) dtype, upcast in-vreg for the EUP op.
    x = x_ref[...].astype(jnp.float32)
    # sigmoid(a*(x-0.5)) == 0.5 + 0.5*tanh(0.5*a*(x-0.5))  -- single EUP transcendental
    z = (0.5 * ALPHA) * (x - 0.5)
    o_ref[...] = (0.5 + 0.5 * jnp.tanh(z)).astype(o_ref.dtype)


def custom_activation(x: jax.Array, *, tile_rows: int = 2048) -> jax.Array:
    """Pallas TPU elementwise 1/(1+exp(-alpha*(x-0.5))) for any shape/dtype."""
    orig_shape = x.shape
    orig_dtype = x.dtype
    n = x.size

    # Only pad the sub-128 tail (no full-tile padding -> no extra HBM copy in the
    # common case where n is already a multiple of 128).
    n_pad = ((n + _LANES - 1) // _LANES) * _LANES
    needs_pad = n_pad != n

    flat = x.reshape(-1)
    if needs_pad:
        flat = jnp.pad(flat, (0, n_pad - n))

    rows = n_pad // _LANES
    x2d = flat.reshape(rows, _LANES)  # keep original dtype: HBM traffic stays narrow

    # Block rows: either the configured tile (multiple of 8) or the full extent for
    # small inputs (full-dim block is always a legal BlockSpec).
    tr = rows if rows <= tile_rows else tile_rows
    grid = (pl.cdiv(rows, tr),)  # Pallas masks the partial last block

    out2d = pl.pallas_call(
        _custom_act_kernel,
        out_shape=jax.ShapeDtypeStruct((rows, _LANES), orig_dtype),
        grid_spec=pltpu.PrefetchScalarGridSpec(
            num_scalar_prefetch=0,
            grid=grid,
            in_specs=[pl.BlockSpec((tr, _LANES), lambda i: (i, 0))],
            out_specs=pl.BlockSpec((tr, _LANES), lambda i: (i, 0)),
        ),
        compiler_params=pltpu.CompilerParams(
            dimension_semantics=("parallel",),  # megacore sharding on v7x
        ),
    )(x2d)

    if needs_pad:
        out = out2d.reshape(-1)[:n].reshape(orig_shape)
    else:
        out = out2d.reshape(orig_shape)  # pure bitcast, no extra HBM pass
    return out


if __name__ == "__main__":
    key = jax.random.PRNGKey(0)

    # NCHW activation input (B=2, C=4, H=16, W=16) -> n = 2048, exact multiple of 128
    x = jax.random.uniform(key, (2, 4, 16, 16), dtype=jnp.float32)
    y = jax.block_until_ready(custom_activation(x))
    y_ref = 1.0 / (1.0 + jnp.exp(-ALPHA * (x - 0.5)))
    assert y.shape == x.shape and y.dtype == x.dtype
    assert jnp.max(jnp.abs(y - y_ref)) < 1e-5

    # Exercise the ragged (sub-128 tail) path as well.
    x2 = jax.random.normal(jax.random.PRNGKey(1), (3, 5, 7), dtype=jnp.float32)
    y2 = jax.block_until_ready(custom_activation(x2))
    y2_ref = 1.0 / (1.0 + jnp.exp(-ALPHA * (x2 - 0.5)))
    assert y2.shape == x2.shape and y2.dtype == x2.dtype
    assert jnp.max(jnp.abs(y2 - y2_ref)) < 1e-5

    print("KERNEL_OK")
</pallas_src>

<mosaic_0001>
module attributes {stable_mosaic.version = 11 : i64} {
  func.func @_custom_act_kernel(%arg0: i32, %arg1: memref<16x128xf32, #tpu.memory_space<vmem>>, %arg2: memref<16x128xf32, #tpu.memory_space<vmem>>) attributes {dimension_semantics = [#tpu.dimension_semantics<parallel>], iteration_bounds = array<i64: 1>, scalar_prefetch = 0 : i64, scratch_operands = 0 : i64, tpu.core_type = #tpu.core_type<tc>, window_params = [{transform_indices = @transform_0, window_bounds = array<i64: 16, 128>}, {transform_indices = @transform_1, window_bounds = array<i64: 16, 128>}]} {
    %c0 = arith.constant 0 : index
    %c0_0 = arith.constant 0 : index
    %0 = vector.load %arg1[%c0, %c0_0] : memref<16x128xf32, #tpu.memory_space<vmem>>, vector<16x128xf32>
    %cst = arith.constant 5.000000e-01 : f32
    %1 = vector.broadcast %cst : f32 to vector<16x128xf32>
    %2 = arith.subf %0, %1 : vector<16x128xf32>
    %cst_1 = arith.constant 2.500000e+01 : f32
    %3 = vector.broadcast %cst_1 : f32 to vector<16x128xf32>
    %4 = arith.mulf %3, %2 : vector<16x128xf32>
    %5 = math.tanh %4 : vector<16x128xf32>
    %cst_2 = arith.constant 5.000000e-01 : f32
    %6 = vector.broadcast %cst_2 : f32 to vector<16x128xf32>
    %7 = arith.mulf %6, %5 : vector<16x128xf32>
    %cst_3 = arith.constant 5.000000e-01 : f32
    %8 = vector.broadcast %cst_3 : f32 to vector<16x128xf32>
    %9 = arith.addf %8, %7 : vector<16x128xf32>
    %c0_4 = arith.constant 0 : index
    %c0_5 = arith.constant 0 : index
    %10 = vector.load %arg2[%c0_4, %c0_5] : memref<16x128xf32, #tpu.memory_space<vmem>>, vector<16x128xf32>
    tpu.vector_store %arg2[%c0_4, %c0_5], %9 {strides = array<i32>} : memref<16x128xf32, #tpu.memory_space<vmem>>, vector<16x128xf32>,
    return
  }
  func.func @transform_0(%arg0: i32) -> (i32, i32) {
    %c0_i32 = arith.constant 0 : i32
    %c0_i32_0 = arith.constant 0 : i32
    return %arg0, %c0_i32 : i32, i32
  }
  func.func @transform_1(%arg0: i32) -> (i32, i32) {
    %c0_i32 = arith.constant 0 : i32
    %c0_i32_0 = arith.constant 0 : i32
    return %arg0, %c0_i32 : i32, i32
  }
}

</mosaic_0001>

<llo_original>
// kernel: tpu_custom_call.1
$region0: #{tpu_custom_call.1}
  #allocation0 [shape = 'u32[]', space=smem, size = 0x4, offset = 0x4, fixed_abs, tag = 'smem constant byte address 0x4 - core index']
  #allocation1 [shape = 'u32[72,128]{1,0:T(1,128)}', space=vmem, size = 0x9000, scoped, tag = 'internal scratch']
  %s0 = inlined_call_operand.hbm [shape: f32[16,128], index: 0, kind: input, shape index: {}]
  %s1 = inlined_call_operand.hbm [shape: f32[16,128], index: 1, kind: output, shape index: {}]
  %s2 = sld [smem:[#allocation0]]
  $region18: #{tpu_custom_call.1} parent=0
    _
  %s4 = ssub.s32 1, %s2
  %s5 = scalar_select 0, %s4, %s2
  $region1: #{tpu_custom_call.1} parent=0
    #allocation2 [shape = 'u8[8192]{0}', space=vmem, size = 0x2000, scoped, tag = 'input window, operand 0, single buffered']
    #allocation3 [shape = 's32[1]{0}', space=sflag, size = 0x4, scoped, tag = 'scoped memory for tpu_custom_call.1']
    #allocation4 [shape = 's32[1]{0}', space=sflag, size = 0x4, scoped, tag = 'scoped memory for tpu_custom_call.1']
    #allocation5 [shape = 'u8[8192]{0}', space=vmem, size = 0x2000, scoped, tag = 'output window, operand 0, single buffered']
    %6 = vsyncpa [#allocation3], 0
    %7 = vsyncpa [#allocation4], 0
    // Predicated region
    $region2: #{tpu_custom_call.1} parent=1 // pred_check
      _
    $region3: #{tpu_custom_call.1} parent=1 // pred_check_branch
      %9 = sbr.rel (0) target = $region5
    $region4: #{tpu_custom_call.1} parent=1 // pred_region
      %11 = vsyncadd [#allocation3], 0
      %s12 = sshll.u32 %s0, 4
      %s13 = int_to_ptr.hbm [resolvable:$true] %s12
      %s14 = sshll.u32 [#allocation2], 4
      %s15 = int_to_ptr.vmem [resolvable:$true] %s14
      %20 = dma.hbm_to_vmem [thread:$0]  %s13, 256, %s15, [#allocation3], 128, 128, 8
    $region5: #{tpu_custom_call.1} parent=1 // pred_fallthru
      _
    // Predicated region
    $region6: #{tpu_custom_call.1} parent=1 // pred_check
      _
    $region7: #{tpu_custom_call.1} parent=1 // pred_check_branch
      %22 = sbr.rel (0) target = $region9
    $region8: #{tpu_custom_call.1} parent=1 // pred_region
      %24 = dma.done [#allocation3], 256
    $region9: #{tpu_custom_call.1} parent=1 // pred_fallthru
      _
    %v25 = vld [vmem:[#allocation2] sm:$0xff]
    %v26 = vld [vmem:[#allocation2 + $0x8] sm:$0xff]
    %v27 = vsub.f32 %v25, 0.5
    %v28 = vsub.f32 %v26, 0.5
    %v29 = vmul.f32 %v27, 25.0
    %v30 = vmul.f32 %v28, 25.0
    %v31 = vtanh.pop %v29
    %v32 = vtanh.pop %v30
    %v33 = vmul.f32 %v31, 0.5
    %v34 = vmul.f32 %v32, 0.5
    %v35 = vadd.f32 %v33, 0.5
    %v36 = vadd.f32 %v34, 0.5
    %37 = vst [vmem:[#allocation5] sm:$0xff] %v35
    %38 = vst [vmem:[#allocation5 + $0x8] sm:$0xff] %v36
    // Predicated region
    $region10: #{tpu_custom_call.1} parent=1 // pred_check
      _
    $region11: #{tpu_custom_call.1} parent=1 // pred_check_branch
      %40 = sbr.rel (0) target = $region13
    $region12: #{tpu_custom_call.1} parent=1 // pred_region
      %42 = vsyncadd [#allocation4], 0
      %s43 = sshll.u32 [#allocation5], 4
      %s44 = int_to_ptr.vmem [resolvable:$true] %s43
      %s45 = sshll.u32 %s1, 4
      %s46 = int_to_ptr.hbm [resolvable:$true] %s45
      %51 = dma.vmem_to_hbm [thread:$0]  %s44, 256, %s46, [#allocation4], 128, 128, 8
    $region13: #{tpu_custom_call.1} parent=1 // pred_fallthru
      _
    // Predicated region
    $region14: #{tpu_custom_call.1} parent=1 // pred_check
      _
    $region15: #{tpu_custom_call.1} parent=1 // pred_check_branch
      %53 = sbr.rel (0) target = $region17
    $region16: #{tpu_custom_call.1} parent=1 // pred_region
      %55 = dma.done [#allocation4], 256
    $region17: #{tpu_custom_call.1} parent=1 // pred_fallthru
      _
    %56 = vsyncpa [#allocation3], 1
    %57 = vsyncpa [#allocation4], 1

</llo_original>
